<compile_context>
chip_gen: v6e
topology: v6e:2x2x1
jax: 0.10.0
libtpu: 0.0.40
codegen_flags: <defaults>
</compile_context>

<pallas_src>
import functools

import jax
import jax.numpy as jnp
import numpy as np
from jax.experimental import pallas as pl
from jax.experimental.pallas import tpu as pltpu


# ------------------------------ tiling helpers ------------------------------
def _round_down_mult(v, m):
    return max(m, (v // m) * m)


def _vmem_capacity_bytes():
    try:
        cap = int(pltpu.get_tpu_info().vmem_capacity_bytes)
        if cap > 0:
            return cap
    except Exception:
        pass
    return 64 * 1024 * 1024          # conservative (v7x-sized) fallback


def _choose_token_tile(B, L, Dx, H, C, budget):
    """Token-axis tile for kernel 1 (must be == L or a multiple of 128)."""
    tl = L if L <= 1024 else 512
    # v7x has two TensorCores: give the 'parallel' grid >= 2 steps when B == 1.
    if B == 1 and tl == L and L >= 256 and L % 256 == 0:
        tl = L // 2

    def cost(t):
        x_blk = 2 * t * Dx                                   # double-buffered input
        w_blk = 2 * (Dx * 2 * H + 2 * H + 2 * H * 3 * C + 3 * C)
        o_blk = 2 * 3 * C * t                                # double-buffered output
        return 4 * (x_blk + w_blk + o_blk)

    while cost(tl) > budget and tl > 128:
        tl = _round_down_mult(tl // 2, 128)
    return tl


def _choose_span_tiles(B, C, L, budget):
    """(channel, i, j) tiles for kernel 2, derived from an explicit VMEM budget."""
    tc = C
    tj = L if L <= 2048 else 2048          # lane-dense j tile: as wide as fits
    ti = L if L <= 256 else 256

    def cost(tc_, ti_, tj_):
        out_blk = 2 * tc_ * ti_ * tj_                        # double-buffered output
        in_blk = 4 * tc_ * (ti_ + tj_)                       # col/qc/row/qr (x2 buf)
        return 4 * (out_blk + in_blk)

    # Shrink i first (keeps stores lane-dense and channels together), then channels,
    # then the j tile only as a last resort.
    while cost(tc, ti, tj) > budget and ti > 8:
        ti = _round_down_mult(ti // 2, 8)
    while cost(tc, ti, tj) > budget and tc > 8:
        tc = _round_down_mult(tc // 2, 8)
    while cost(tc, ti, tj) > budget and tj > 128:
        tj = _round_down_mult(tj // 2, 128)

    # v7x dual TensorCore: try to guarantee >= 2 grid steps when B == 1.
    if B == 1 and pl.cdiv(C, tc) * pl.cdiv(L, ti) * pl.cdiv(L, tj) < 2:
        if L >= 16:
            ti = _round_down_mult(max(8, ti // 2), 8)
        elif C >= 16:
            tc = _round_down_mult(max(8, tc // 2), 8)
    return tc, ti, tj


# --------------- Kernel 1: fused MLP heads + fused per-token projections ---------------
def _token_kernel(x_ref, wcat_ref, bcat_ref, wproj_ref, bproj_ref, o_ref):
    # x: (1, TL, Dx); wcat: (Dx, 2H); bcat: (1, 2H); wproj: (2H, 3C); bproj: (1, 3C)
    # One matmul produces [a | c] = [mlp1(x) | mlp2(x)] (LeakyReLU(0.1) applied to both).
    h = jnp.dot(x_ref[0], wcat_ref[...], preferred_element_type=jnp.float32) + bcat_ref[...]
    h = jnp.where(h > 0, h, 0.1 * h)
    # One matmul produces [col | row | qa] (+ ff bias folded into the col slice).
    p = jnp.dot(h, wproj_ref[...], preferred_element_type=jnp.float32) + bproj_ref[...]
    # Channel-major, token-lane-dense store (XLU transpose of a tiny (TL, 3C) tile).
    o_ref[0] = jnp.transpose(p, (1, 0))


# --------------- Kernel 2: broadcast span expansion, lane-dense in j ---------------
def _span_kernel(col_ref, row_ref, qc_ref, qr_ref, o_ref):
    # col/qc: (1, TC, TJ)  indexed by j-tile;  row/qr: (1, TC, TI)  indexed by i-tile
    # o:      (1, TC, TI, TJ)
    tc, ti, tj = o_ref.shape[1], o_ref.shape[2], o_ref.shape[3]
    col = col_ref[0]
    qc = qc_ref[0]
    row = row_ref[0]
    qr = qr_ref[0]

    i0 = pl.program_id(2) * ti
    j0 = pl.program_id(3) * tj
    j_idx = jax.lax.broadcasted_iota(jnp.int32, (ti, tj), 1) + j0
    i_idx = jax.lax.broadcasted_iota(jnp.int32, (ti, tj), 0) + i0
    den = j_idx - i_idx + 1                                   # span length (can be <= 0)
    den_f = den.astype(jnp.float32)
    # Reference uses 1/(den + 1e-9): for any nonzero integer den the 1e-9 rounds away in
    # f32; at den == 0 the 'mean i' numerator is exactly 0, so force the factor to 0
    # (single select; avoids 0 * inf -> NaN of a raw divide).
    inv = jnp.where(den == 0, 0.0, 1.0 / den_f)

    o_ref[0] = (col[:, None, :] + row[:, :, None]
                + (qc[:, None, :] - qr[:, :, None]) * inv[None, :, :])


# ------------------------------ full forward ------------------------------
def span_labeler_forward(params, x_const, x_const2=None, *, mode):
    """SpanLabeler forward.  Returns (B, out_dim, L, L), matching the PyTorch module."""
    shared = (x_const2 is None) or (x_const2 is x_const)
    B, L, D_in = x_const.shape
    H = params['w1'].shape[0]
    C = params['wf'].shape[0]

    f32 = jnp.float32
    w1t = params['w1'].astype(f32).T
    w2t = params['w2'].astype(f32).T
    b1 = params['b1'].astype(f32)
    b2 = params['b2'].astype(f32)
    wf = params['wf'].astype(f32)
    bf = params['bf'].astype(f32)

    # ---- fold the ff weight into per-token projection matrices (factored form) ----
    z = jnp.zeros((C, H), f32)
    wa_col = wc_col = wa_row = wc_row = w_mean = z
    for idx, m in enumerate(mode):
        w_m = wf[:, idx * H:(idx + 1) * H]
        if m == 'i-j':                      # feat = A[j] - C[i]
            wa_col = wa_col + w_m; wc_row = wc_row - w_m
        elif m == 'j-i':                    # feat = C[i] - A[j]
            wa_col = wa_col - w_m; wc_row = wc_row + w_m
        elif m == 'i+j':                    # feat = (C[j] + A[i]) / 2
            wc_col = wc_col + 0.5 * w_m; wa_row = wa_row + 0.5 * w_m
        elif m == 'i':                      # feat = A[j]
            wa_col = wa_col + w_m
        elif m == 'j':                      # feat = C[i]
            wc_row = wc_row + w_m
        elif m == 'mean i':                 # feat = (cum[j] - cum[i-1]) / (j-i+1+1e-9)
            w_mean = w_mean + w_m
        else:
            raise ValueError(f"unknown mode {m!r}")

    # ---- fused token-level weights: one "heads" GEMM + one "projection" GEMM ----
    if shared:
        xin = x_const.astype(f32)
        Dx = D_in
        wcat = jnp.concatenate([w1t, w2t], axis=1)                     # (D_in, 2H)
    else:
        xin = jnp.concatenate([x_const, x_const2], axis=-1).astype(f32)
        Dx = 2 * D_in
        wcat = jnp.zeros((2 * D_in, 2 * H), f32)
        wcat = wcat.at[:D_in, :H].set(w1t).at[D_in:, H:].set(w2t)      # block-diagonal
    bcat = jnp.concatenate([b1, b2]).reshape(1, 2 * H)

    w_top = jnp.concatenate([wa_col.T, wa_row.T, w_mean.T], axis=1)    # A rows (H, 3C)
    w_bot = jnp.concatenate([wc_col.T, wc_row.T, jnp.zeros((H, C), f32)], axis=1)
    wproj = jnp.concatenate([w_top, w_bot], axis=0)                    # (2H, 3C)
    bproj = jnp.concatenate([bf.reshape(1, C), jnp.zeros((1, 2 * C), f32)], axis=1)

    # ---- per-generation VMEM budget / limit ----
    vmem_cap = _vmem_capacity_bytes()                     # 128 MiB v5e/v6e, 64 MiB v7x
    vmem_limit = int(min(0.75 * vmem_cap, 100 * 2 ** 20))
    block_budget = int(0.6 * vmem_limit)

    # ---- kernel 1: (B, 3C, L) channel-major per-token projections ----
    tl = _choose_token_tile(B, L, Dx, H, C, block_budget)
    y = pl.pallas_call(
        _token_kernel,
        out_shape=jax.ShapeDtypeStruct((B, 3 * C, L), f32),
        grid_spec=pltpu.PrefetchScalarGridSpec(
            num_scalar_prefetch=0,
            grid=(B, pl.cdiv(L, tl)),
            in_specs=[
                pl.BlockSpec((1, tl, Dx), lambda b, t: (b, t, 0)),     # tokens
                pl.BlockSpec((Dx, 2 * H), lambda b, t: (0, 0)),        # [w1^T | w2^T]
                pl.BlockSpec((1, 2 * H), lambda b, t: (0, 0)),         # [b1 | b2]
                pl.BlockSpec((2 * H, 3 * C), lambda b, t: (0, 0)),     # fused projection
                pl.BlockSpec((1, 3 * C), lambda b, t: (0, 0)),         # [bf | 0 | 0]
            ],
            out_specs=pl.BlockSpec((1, 3 * C, tl), lambda b, t: (b, 0, t)),
        ),
        compiler_params=pltpu.CompilerParams(
            dimension_semantics=("parallel", "parallel"),
            vmem_limit_bytes=vmem_limit),
    )(xin, wcat, bcat, wproj, bproj)

    col = y[:, 0:C, :]            # per-token column contribution (ff bias folded in)
    row = y[:, C:2 * C, :]        # per-token row contribution
    qa = y[:, 2 * C:3 * C, :]     # per-token 'mean i' projection
    # 'mean i' numerator: cumsum commutes with the linear projection; qrow is a bitwise
    # shift of qcol, so the numerator is exactly 0 on the j == i-1 anti-diagonal.
    qcol = jnp.cumsum(qa, axis=2)
    qrow = jnp.concatenate([jnp.zeros((B, C, 1), f32), qcol[:, :, :-1]], axis=2)

    # ---- kernel 2: broadcast expansion, output directly in (B, out_dim, i, j) ----
    tc, ti, tj = _choose_span_tiles(B, C, L, block_budget)
    return pl.pallas_call(
        _span_kernel,
        out_shape=jax.ShapeDtypeStruct((B, C, L, L), f32),
        grid_spec=pltpu.PrefetchScalarGridSpec(
            num_scalar_prefetch=0,
            grid=(B, pl.cdiv(C, tc), pl.cdiv(L, ti), pl.cdiv(L, tj)),
            in_specs=[
                pl.BlockSpec((1, tc, tj), lambda b, c, i, j: (b, c, j)),   # col
                pl.BlockSpec((1, tc, ti), lambda b, c, i, j: (b, c, i)),   # row
                pl.BlockSpec((1, tc, tj), lambda b, c, i, j: (b, c, j)),   # qcol
                pl.BlockSpec((1, tc, ti), lambda b, c, i, j: (b, c, i)),   # qrow
            ],
            out_specs=pl.BlockSpec((1, tc, ti, tj), lambda b, c, i, j: (b, c, i, j)),
        ),
        compiler_params=pltpu.CompilerParams(
            dimension_semantics=("parallel", "parallel", "parallel", "parallel"),
            vmem_limit_bytes=vmem_limit),
    )(col, row, qcol, qrow)


# --------------------- pure-JAX reference (for verification) ---------------------
def _reference(params, x_const, x_const2, mode):
    def mlp(x, w, b):
        h = x @ w.T + b
        return jnp.where(h > 0, h, 0.1 * h)

    x1 = mlp(x_const, params['w1'], params['b1'])
    x2 = mlp(x_const2, params['w2'], params['b2'])
    B, L, H = x1.shape
    feats = []
    for m in mode:
        if m == 'i-j':
            feats.append(x1[:, None, :, :] - x2[:, :, None, :])
        elif m == 'j-i':
            feats.append(-x1[:, None, :, :] + x2[:, :, None, :])
        elif m == 'i+j':
            feats.append((x2[:, None, :, :] + x1[:, :, None, :]) / 2)
        elif m == 'i':
            feats.append(jnp.broadcast_to(x1[:, None, :, :], (B, L, L, H)))
        elif m == 'j':
            feats.append(jnp.broadcast_to(x2[:, :, None, :], (B, L, L, H)))
        elif m == 'mean i':
            cum = jnp.cumsum(x1, axis=1)
            cprev = jnp.concatenate([jnp.zeros((B, 1, H), x1.dtype), cum[:, :-1]], axis=1)
            num = cum[:, None, :, :] - cprev[:, :, None, :]
            # host-side denominator so the +1e-9 cannot be re-associated away by XLA
            j_idx = np.arange(L)[None, :]
            i_idx = np.arange(L)[:, None]
            den = (j_idx - i_idx + 1).astype(np.float32)
            den = np.where(den == 0.0, np.float32(1e-9), den)
            feats.append(num / jnp.asarray(den)[None, :, :, None])
    feat = jnp.concatenate(feats, axis=-1)
    out = feat @ params['wf'].T + params['bf']
    return jnp.transpose(out, (0, 3, 1, 2))


# --------------------- main ---------------------
if __name__ == "__main__":
    B, L, IN_DIM, HIDDEN, OUT_DIM = 2, 8, 32, 32, 8
    MODE = ('i-j', 'j-i', 'i+j', 'i', 'j', 'mean i')

    key = jax.random.PRNGKey(0)
    k = jax.random.split(key, 7)
    params = {
        'w1': jax.random.normal(k[0], (HIDDEN, IN_DIM), jnp.float32) * 0.1,
        'b1': jax.random.normal(k[1], (HIDDEN,), jnp.float32) * 0.1,
        'w2': jax.random.normal(k[2], (HIDDEN, IN_DIM), jnp.float32) * 0.1,
        'b2': jax.random.normal(k[3], (HIDDEN,), jnp.float32) * 0.1,
        'wf': jax.random.normal(k[4], (OUT_DIM, HIDDEN * len(MODE)), jnp.float32) * 0.1,
        'bf': jax.random.normal(k[5], (OUT_DIM,), jnp.float32) * 0.1,
    }
    x = jax.random.normal(k[6], (B, L, IN_DIM), jnp.float32)

    fwd = jax.jit(functools.partial(span_labeler_forward, mode=MODE))
    out = jax.block_until_ready(fwd(params, x))
    assert out.shape == (B, OUT_DIM, L, L), out.shape

    ref = jax.block_until_ready(_reference(params, x, x, MODE))
    np.testing.assert_allclose(np.asarray(out), np.asarray(ref), rtol=1e-4, atol=1e-4)

    print("KERNEL_OK")
</pallas_src>

<mosaic_0001>
module attributes {stable_mosaic.version = 11 : i64} {
  func.func @_span_kernel(%arg0: i32, %arg1: i32, %arg2: i32, %arg3: i32, %arg4: memref<1x8x8xf32, #tpu.memory_space<vmem>>, %arg5: memref<1x8x8xf32, #tpu.memory_space<vmem>>, %arg6: memref<1x8x8xf32, #tpu.memory_space<vmem>>, %arg7: memref<1x8x8xf32, #tpu.memory_space<vmem>>, %arg8: memref<1x8x8x8xf32, #tpu.memory_space<vmem>>) attributes {dimension_semantics = [#tpu.dimension_semantics<parallel>, #tpu.dimension_semantics<parallel>, #tpu.dimension_semantics<parallel>, #tpu.dimension_semantics<parallel>], iteration_bounds = array<i64: 2, 1, 1, 1>, scalar_prefetch = 0 : i64, scratch_operands = 0 : i64, tpu.core_type = #tpu.core_type<tc>, window_params = [{transform_indices = @transform_0, window_bounds = array<i64: 1, 8, 8>}, {transform_indices = @transform_1, window_bounds = array<i64: 1, 8, 8>}, {transform_indices = @transform_2, window_bounds = array<i64: 1, 8, 8>}, {transform_indices = @transform_3, window_bounds = array<i64: 1, 8, 8>}, {transform_indices = @transform_4, window_bounds = array<i64: 1, 8, 8, 8>}]} {
    %c0 = arith.constant 0 : index
    %c0_0 = arith.constant 0 : index
    %c0_1 = arith.constant 0 : index
    %0 = vector.load %arg4[%c0, %c0_0, %c0_1] : memref<1x8x8xf32, #tpu.memory_space<vmem>>, vector<1x8x8xf32>
    %1 = vector.shape_cast %0 : vector<1x8x8xf32> to vector<8x8xf32>
    %c0_2 = arith.constant 0 : index
    %c0_3 = arith.constant 0 : index
    %c0_4 = arith.constant 0 : index
    %2 = vector.load %arg6[%c0_2, %c0_3, %c0_4] : memref<1x8x8xf32, #tpu.memory_space<vmem>>, vector<1x8x8xf32>
    %3 = vector.shape_cast %2 : vector<1x8x8xf32> to vector<8x8xf32>
    %c0_5 = arith.constant 0 : index
    %c0_6 = arith.constant 0 : index
    %c0_7 = arith.constant 0 : index
    %4 = vector.load %arg5[%c0_5, %c0_6, %c0_7] : memref<1x8x8xf32, #tpu.memory_space<vmem>>, vector<1x8x8xf32>
    %5 = vector.shape_cast %4 : vector<1x8x8xf32> to vector<8x8xf32>
    %c0_8 = arith.constant 0 : index
    %c0_9 = arith.constant 0 : index
    %c0_10 = arith.constant 0 : index
    %6 = vector.load %arg7[%c0_8, %c0_9, %c0_10] : memref<1x8x8xf32, #tpu.memory_space<vmem>>, vector<1x8x8xf32>
    %7 = vector.shape_cast %6 : vector<1x8x8xf32> to vector<8x8xf32>
    %c8_i32 = arith.constant 8 : i32
    %8 = arith.muli %arg2, %c8_i32 : i32
    %c8_i32_11 = arith.constant 8 : i32
    %9 = arith.muli %arg3, %c8_i32_11 : i32
    %10 = tpu.iota {dimensions = array<i32: 1>} : vector<8x8xi32>
    %11 = vector.broadcast %9 : i32 to vector<8x8xi32>
    %12 = arith.addi %10, %11 : vector<8x8xi32>
    %13 = tpu.iota {dimensions = array<i32: 0>} : vector<8x8xi32>
    %14 = vector.broadcast %8 : i32 to vector<8x8xi32>
    %15 = arith.addi %13, %14 : vector<8x8xi32>
    %16 = arith.subi %12, %15 : vector<8x8xi32>
    %c1_i32 = arith.constant 1 : i32
    %17 = vector.broadcast %c1_i32 : i32 to vector<8x8xi32>
    %18 = arith.addi %16, %17 : vector<8x8xi32>
    %19 = arith.sitofp %18 : vector<8x8xi32> to vector<8x8xf32>
    %c0_i32 = arith.constant 0 : i32
    %20 = vector.broadcast %c0_i32 : i32 to vector<8x8xi32>
    %21 = arith.cmpi eq, %18, %20 : vector<8x8xi32>
    %cst = arith.constant 1.000000e+00 : f32
    %22 = vector.broadcast %cst : f32 to vector<8x8xf32>
    %23 = arith.divf %22, %19 : vector<8x8xf32>
    %cst_12 = arith.constant 0.000000e+00 : f32
    %24 = vector.broadcast %cst_12 : f32 to vector<8x8xf32>
    %25 = arith.select %21, %24, %23 : vector<8x8xi1>, vector<8x8xf32>
    %26 = vector.shape_cast %1 : vector<8x8xf32> to vector<8x1x8xf32>
    %27 = vector.shape_cast %5 : vector<8x8xf32> to vector<8x8x1xf32>
    %28 = vector.broadcast %26 : vector<8x1x8xf32> to vector<8x8x8xf32>
    %29 = vector.broadcast %27 : vector<8x8x1xf32> to vector<8x8x8xf32>
    %30 = arith.addf %28, %29 : vector<8x8x8xf32>
    %31 = vector.shape_cast %3 : vector<8x8xf32> to vector<8x1x8xf32>
    %32 = vector.shape_cast %7 : vector<8x8xf32> to vector<8x8x1xf32>
    %33 = vector.broadcast %31 : vector<8x1x8xf32> to vector<8x8x8xf32>
    %34 = vector.broadcast %32 : vector<8x8x1xf32> to vector<8x8x8xf32>
    %35 = arith.subf %33, %34 : vector<8x8x8xf32>
    %36 = vector.shape_cast %25 : vector<8x8xf32> to vector<1x8x8xf32>
    %37 = vector.broadcast %36 : vector<1x8x8xf32> to vector<8x8x8xf32>
    %38 = arith.mulf %35, %37 : vector<8x8x8xf32>
    %39 = arith.addf %30, %38 : vector<8x8x8xf32>
    %c0_13 = arith.constant 0 : index
    %c0_14 = arith.constant 0 : index
    %c0_15 = arith.constant 0 : index
    %c0_16 = arith.constant 0 : index
    %40 = vector.load %arg8[%c0_13, %c0_14, %c0_15, %c0_16] : memref<1x8x8x8xf32, #tpu.memory_space<vmem>>, vector<1x8x8x8xf32>
    %41 = vector.shape_cast %40 : vector<1x8x8x8xf32> to vector<8x8x8xf32>
    %42 = vector.shape_cast %39 : vector<8x8x8xf32> to vector<1x8x8x8xf32>
    tpu.vector_store %arg8[%c0_13, %c0_14, %c0_15, %c0_16], %42 {strides = array<i32>} : memref<1x8x8x8xf32, #tpu.memory_space<vmem>>, vector<1x8x8x8xf32>,
    return
  }
  func.func @transform_0(%arg0: i32, %arg1: i32, %arg2: i32, %arg3: i32) -> (i32, i32, i32) {
    %c0_i32 = arith.constant 0 : i32
    return %arg0, %arg1, %arg3 : i32, i32, i32
  }
  func.func @transform_1(%arg0: i32, %arg1: i32, %arg2: i32, %arg3: i32) -> (i32, i32, i32) {
    %c0_i32 = arith.constant 0 : i32
    return %arg0, %arg1, %arg2 : i32, i32, i32
  }
  func.func @transform_2(%arg0: i32, %arg1: i32, %arg2: i32, %arg3: i32) -> (i32, i32, i32) {
    %c0_i32 = arith.constant 0 : i32
    return %arg0, %arg1, %arg3 : i32, i32, i32
  }
  func.func @transform_3(%arg0: i32, %arg1: i32, %arg2: i32, %arg3: i32) -> (i32, i32, i32) {
    %c0_i32 = arith.constant 0 : i32
    return %arg0, %arg1, %arg2 : i32, i32, i32
  }
  func.func @transform_4(%arg0: i32, %arg1: i32, %arg2: i32, %arg3: i32) -> (i32, i32, i32, i32) {
    %c0_i32 = arith.constant 0 : i32
    return %arg0, %arg1, %arg2, %arg3 : i32, i32, i32, i32
  }
}

module attributes {stable_mosaic.version = 11 : i64} {
  func.func @_token_kernel(%arg0: i32, %arg1: i32, %arg2: memref<1x8x32xf32, #tpu.memory_space<vmem>>, %arg3: memref<32x64xf32, #tpu.memory_space<vmem>>, %arg4: memref<1x64xf32, #tpu.memory_space<vmem>>, %arg5: memref<64x24xf32, #tpu.memory_space<vmem>>, %arg6: memref<1x24xf32, #tpu.memory_space<vmem>>, %arg7: memref<1x24x8xf32, #tpu.memory_space<vmem>>) attributes {dimension_semantics = [#tpu.dimension_semantics<parallel>, #tpu.dimension_semantics<parallel>], iteration_bounds = array<i64: 2, 1>, scalar_prefetch = 0 : i64, scratch_operands = 0 : i64, tpu.core_type = #tpu.core_type<tc>, window_params = [{transform_indices = @transform_0, window_bounds = array<i64: 1, 8, 32>}, {pipeline_mode = #tpu.pipeline_mode<synchronous>, transform_indices = @transform_1, window_bounds = array<i64: 32, 64>}, {pipeline_mode = #tpu.pipeline_mode<synchronous>, transform_indices = @transform_2, window_bounds = array<i64: 1, 64>}, {pipeline_mode = #tpu.pipeline_mode<synchronous>, transform_indices = @transform_3, window_bounds = array<i64: 64, 24>}, {pipeline_mode = #tpu.pipeline_mode<synchronous>, transform_indices = @transform_4, window_bounds = array<i64: 1, 24>}, {transform_indices = @transform_5, window_bounds = array<i64: 1, 24, 8>}]} {
    %c0 = arith.constant 0 : index
    %c0_0 = arith.constant 0 : index
    %c0_1 = arith.constant 0 : index
    %0 = vector.load %arg2[%c0, %c0_0, %c0_1] : memref<1x8x32xf32, #tpu.memory_space<vmem>>, vector<1x8x32xf32>
    %1 = vector.shape_cast %0 : vector<1x8x32xf32> to vector<8x32xf32>
    %c0_2 = arith.constant 0 : index
    %c0_3 = arith.constant 0 : index
    %2 = vector.load %arg3[%c0_2, %c0_3] : memref<32x64xf32, #tpu.memory_space<vmem>>, vector<32x64xf32>
    %cst = arith.constant dense<0.000000e+00> : vector<8x64xf32>
    %3 = tpu.matmul %1, %2, %cst {dimension_numbers = #tpu.dot_dimension_numbers<[1], [0], [0], [1], [0, 0, 1, 1], [], []>} : vector<8x32xf32>, vector<32x64xf32>, vector<8x64xf32> -> vector<8x64xf32>
    %c0_4 = arith.constant 0 : index
    %c0_5 = arith.constant 0 : index
    %4 = vector.load %arg4[%c0_4, %c0_5] : memref<1x64xf32, #tpu.memory_space<vmem>>, vector<1x64xf32>
    %5 = vector.broadcast %4 : vector<1x64xf32> to vector<8x64xf32>
    %6 = arith.addf %3, %5 : vector<8x64xf32>
    %cst_6 = arith.constant 0.000000e+00 : f32
    %7 = vector.broadcast %cst_6 : f32 to vector<8x64xf32>
    %8 = arith.cmpf ogt, %6, %7 : vector<8x64xf32>
    %cst_7 = arith.constant 1.000000e-01 : f32
    %9 = vector.broadcast %cst_7 : f32 to vector<8x64xf32>
    %10 = arith.mulf %9, %6 : vector<8x64xf32>
    %11 = arith.select %8, %6, %10 : vector<8x64xi1>, vector<8x64xf32>
    %c0_8 = arith.constant 0 : index
    %c0_9 = arith.constant 0 : index
    %12 = vector.load %arg5[%c0_8, %c0_9] : memref<64x24xf32, #tpu.memory_space<vmem>>, vector<64x24xf32>
    %cst_10 = arith.constant dense<0.000000e+00> : vector<8x24xf32>
    %13 = tpu.matmul %11, %12, %cst_10 {dimension_numbers = #tpu.dot_dimension_numbers<[1], [0], [0], [1], [0, 0, 1, 1], [], []>} : vector<8x64xf32>, vector<64x24xf32>, vector<8x24xf32> -> vector<8x24xf32>
    %c0_11 = arith.constant 0 : index
    %c0_12 = arith.constant 0 : index
    %14 = vector.load %arg6[%c0_11, %c0_12] : memref<1x24xf32, #tpu.memory_space<vmem>>, vector<1x24xf32>
    %15 = vector.broadcast %14 : vector<1x24xf32> to vector<8x24xf32>
    %16 = arith.addf %13, %15 : vector<8x24xf32>
    %17 = tpu.transpose %16, [1, 0] : vector<8x24xf32> -> vector<24x8xf32>
    %c0_13 = arith.constant 0 : index
    %c0_14 = arith.constant 0 : index
    %c0_15 = arith.constant 0 : index
    %18 = vector.load %arg7[%c0_13, %c0_14, %c0_15] : memref<1x24x8xf32, #tpu.memory_space<vmem>>, vector<1x24x8xf32>
    %19 = vector.shape_cast %18 : vector<1x24x8xf32> to vector<24x8xf32>
    %20 = vector.shape_cast %17 : vector<24x8xf32> to vector<1x24x8xf32>
    tpu.vector_store %arg7[%c0_13, %c0_14, %c0_15], %20 {strides = array<i32>} : memref<1x24x8xf32, #tpu.memory_space<vmem>>, vector<1x24x8xf32>,
    return
  }
  func.func @transform_0(%arg0: i32, %arg1: i32) -> (i32, i32, i32) {
    %c0_i32 = arith.constant 0 : i32
    %c0_i32_0 = arith.constant 0 : i32
    return %arg0, %arg1, %c0_i32 : i32, i32, i32
  }
  func.func @transform_1(%arg0: i32, %arg1: i32) -> (i32, i32) {
    %c0_i32 = arith.constant 0 : i32
    %c0_i32_0 = arith.constant 0 : i32
    %c0_i32_1 = arith.constant 0 : i32
    return %c0_i32, %c0_i32_0 : i32, i32
  }
  func.func @transform_2(%arg0: i32, %arg1: i32) -> (i32, i32) {
    %c0_i32 = arith.constant 0 : i32
    %c0_i32_0 = arith.constant 0 : i32
    %c0_i32_1 = arith.constant 0 : i32
    return %c0_i32, %c0_i32_0 : i32, i32
  }
  func.func @transform_3(%arg0: i32, %arg1: i32) -> (i32, i32) {
    %c0_i32 = arith.constant 0 : i32
    %c0_i32_0 = arith.constant 0 : i32
    %c0_i32_1 = arith.constant 0 : i32
    return %c0_i32, %c0_i32_0 : i32, i32
  }
  func.func @transform_4(%arg0: i32, %arg1: i32) -> (i32, i32) {
    %c0_i32 = arith.constant 0 : i32
    %c0_i32_0 = arith.constant 0 : i32
    %c0_i32_1 = arith.constant 0 : i32
    return %c0_i32, %c0_i32_0 : i32, i32
  }
  func.func @transform_5(%arg0: i32, %arg1: i32) -> (i32, i32, i32) {
    %c0_i32 = arith.constant 0 : i32
    %c0_i32_0 = arith.constant 0 : i32
    return %arg0, %c0_i32, %arg1 : i32, i32, i32
  }
}

</mosaic_0001>

<llo_original>
// kernel: span_labeler_forward.2
$region0: #{span_labeler_forward.2}
  #allocation0 [shape = 'u32[]', space=smem, size = 0x4, offset = 0x4, fixed_abs, tag = 'smem constant byte address 0x4 - core index']
  #allocation1 [shape = 'u32[144,128]{1,0:T(1,128)}', space=vmem, size = 0x12000, scoped, tag = 'internal scratch']
  %s0 = inlined_call_operand.vmem [shape: f32[2,8,32], index: 0, kind: input, shape index: {}]
  %s1 = inlined_call_operand.vmem [shape: f32[32,64], index: 1, kind: input, shape index: {}]
  %s2 = inlined_call_operand.vmem [shape: f32[1,64], index: 2, kind: input, shape index: {}]
  %s3 = inlined_call_operand.vmem [shape: f32[64,24], index: 3, kind: input, shape index: {}]
  %s4 = inlined_call_operand.vmem [shape: f32[1,24], index: 4, kind: input, shape index: {}]
  %s5 = inlined_call_operand.vmem [shape: f32[2,24,8], index: 5, kind: output, shape index: {}]
  %s6 = sld [smem:[#allocation0]]
  $region53: #{span_labeler_forward.2} parent=0
    _
  %s8 = ssub.s32 1, %s6
  %s9 = scalar_select 0, %s8, %s6
  loop: start=0, step=1, limit=4
  $region2: #{span_labeler_forward.2} parent=0 // loop_pre_header
    _
  $region3: #{span_labeler_forward.2} parent=0 // loop_header
    %s11 = sphi 0, %s15
    %p12 = scmp.ge.s32.totalorder %s11, 4
    %s18 = sphi 0, %s30
    %s19 = sphi 0, %s26
    %s20 = sphi 0, %s18
    %s21 = sphi 0, %s19
    %s22 = sphi 0, %s20
    %s23 = sphi 0, %s21
    %s35 = sphi 0, %s37
    %s38 = sphi 0, %s35
    %s39 = sphi 0, %s38
    %s55 = sphi 0, %s39
    %s59 = sphi 0, %s59
    %s61 = sphi 0, %s59
    %s62 = sphi 0, %s61
    %s76 = sphi 0, %s62
    %s80 = sphi 0, %s80
    %s82 = sphi 0, %s80
    %s83 = sphi 0, %s82
    %s97 = sphi 0, %s83
    %s101 = sphi 0, %s101
    %s103 = sphi 0, %s101
    %s104 = sphi 0, %s103
    %s118 = sphi 0, %s104
    %s122 = sphi 0, %s122
    %s124 = sphi 0, %s122
    %s125 = sphi 0, %s124
    %s139 = sphi 0, %s125
    %s147 = sphi 0, %s149
    %s150 = sphi 0, %s147
    %s151 = sphi 0, %s150
    %s167 = sphi 0, %s151
  $region4: #{span_labeler_forward.2} parent=0 // loop_header_branch
    %14 = sbr.rel (%p12) target = $region8
  $region5: #{span_labeler_forward.2} parent=0 // loop_body
    %s16 = ssub.s32 %s11, 1
    %s17 = ssub.s32 %s11, 2
    %s24 = sadd.s32 1, %s19
    %p25 = scmp.ge.s32.totalorder %s24, 1
    %s26 = scalar_select %p25, 0, %s24
    %s27 = sadd.s32 1, %s18
    %s28 = scalar_select %p25, %s27, %s18
    %p29 = scmp.ge.s32.totalorder %s28, 2
    %s30 = scalar_select %p29, 0, %s28
    %s31 = ssub.s32 %s18, %s30
    %s32 = ssub.s32 %s19, %s26
    %s33 = sor.u32 %s31, %s32
    %p34 = scmp.eq.s32.totalorder %s33, 0
    %s36 = sadd.s32 %s35, 1
    %s37 = scalar_select %p34, %s35, %s36
    %p40 = pneg %p34
    %p41 = scmp.eq.s32.totalorder %s11, 1
    %p42 = por %p40, %p41
    %p43 = scmp.ne.s32.totalorder %s35, %s38
    %p44 = scmp.eq.s32.totalorder %s11, 0
    %p45 = por %p43, %p44
    %p46 = scmp.ne.s32.totalorder %s35, %s38
    %p47 = scmp.eq.s32.totalorder %s16, 1
    %p48 = por %p46, %p47
    %p49 = scmp.ne.s32.totalorder %s38, %s39
    %p50 = scmp.eq.s32.totalorder %s16, 0
    %p51 = por %p49, %p50
    %p52 = scmp.ne.s32.totalorder %s38, %s39
    %p53 = scmp.eq.s32.totalorder %s17, 1
    %p54 = por %p52, %p53
    %p56 = scmp.ne.s32.totalorder %s39, %s55
    %p57 = scmp.eq.s32.totalorder %s17, 0
    %p58 = por %p56, %p57
    %s60 = sadd.s32 %s59, 1
    %p63 = scmp.eq.s32.totalorder %s11, 1
    %p64 = scmp.ne.s32.totalorder %s59, %s61
    %p65 = scmp.eq.s32.totalorder %s11, 0
    %p66 = por %p64, %p65
    %p67 = scmp.ne.s32.totalorder %s59, %s61
    %p68 = scmp.eq.s32.totalorder %s16, 1
    %p69 = por %p67, %p68
    %p70 = scmp.ne.s32.totalorder %s61, %s62
    %p71 = scmp.eq.s32.totalorder %s16, 0
    %p72 = por %p70, %p71
    %p73 = scmp.ne.s32.totalorder %s61, %s62
    %p74 = scmp.eq.s32.totalorder %s17, 1
    %p75 = por %p73, %p74
    %p77 = scmp.ne.s32.totalorder %s62, %s76
    %p78 = scmp.eq.s32.totalorder %s17, 0
    %p79 = por %p77, %p78
    %s81 = sadd.s32 %s80, 1
    %p84 = scmp.eq.s32.totalorder %s11, 1
    %p85 = scmp.ne.s32.totalorder %s80, %s82
    %p86 = scmp.eq.s32.totalorder %s11, 0
    %p87 = por %p85, %p86
    %p88 = scmp.ne.s32.totalorder %s80, %s82
    %p89 = scmp.eq.s32.totalorder %s16, 1
    %p90 = por %p88, %p89
    %p91 = scmp.ne.s32.totalorder %s82, %s83
    %p92 = scmp.eq.s32.totalorder %s16, 0
    %p93 = por %p91, %p92
    %p94 = scmp.ne.s32.totalorder %s82, %s83
    %p95 = scmp.eq.s32.totalorder %s17, 1
    %p96 = por %p94, %p95
    %p98 = scmp.ne.s32.totalorder %s83, %s97
    %p99 = scmp.eq.s32.totalorder %s17, 0
    %p100 = por %p98, %p99
    %s102 = sadd.s32 %s101, 1
    %p105 = scmp.eq.s32.totalorder %s11, 1
    %p106 = scmp.ne.s32.totalorder %s101, %s103
    %p107 = scmp.eq.s32.totalorder %s11, 0
    %p108 = por %p106, %p107
    %p109 = scmp.ne.s32.totalorder %s101, %s103
    %p110 = scmp.eq.s32.totalorder %s16, 1
    %p111 = por %p109, %p110
    %p112 = scmp.ne.s32.totalorder %s103, %s104
    %p113 = scmp.eq.s32.totalorder %s16, 0
    %p114 = por %p112, %p113
    %p115 = scmp.ne.s32.totalorder %s103, %s104
    %p116 = scmp.eq.s32.totalorder %s17, 1
    %p117 = por %p115, %p116
    %p119 = scmp.ne.s32.totalorder %s104, %s118
    %p120 = scmp.eq.s32.totalorder %s17, 0
    %p121 = por %p119, %p120
    %s123 = sadd.s32 %s122, 1
    %p126 = scmp.eq.s32.totalorder %s11, 1
    %p127 = scmp.ne.s32.totalorder %s122, %s124
    %p128 = scmp.eq.s32.totalorder %s11, 0
    %p129 = por %p127, %p128
    %p130 = scmp.ne.s32.totalorder %s122, %s124
    %p131 = scmp.eq.s32.totalorder %s16, 1
    %p132 = por %p130, %p131
    %p133 = scmp.ne.s32.totalorder %s124, %s125
    %p134 = scmp.eq.s32.totalorder %s16, 0
    %p135 = por %p133, %p134
    %p136 = scmp.ne.s32.totalorder %s124, %s125
    %p137 = scmp.eq.s32.totalorder %s17, 1
    %p138 = por %p136, %p137
    %p140 = scmp.ne.s32.totalorder %s125, %s139
    %p141 = scmp.eq.s32.totalorder %s17, 0
    %p142 = por %p140, %p141
    %s143 = ssub.s32 %s18, %s30
    %s144 = ssub.s32 %s19, %s26
    %s145 = sor.u32 %s143, %s144
    %p146 = scmp.eq.s32.totalorder %s145, 0
    %s148 = sadd.s32 %s147, 1
    %s149 = scalar_select %p146, %s147, %s148
    %p152 = pneg %p146
    %p153 = scmp.eq.s32.totalorder %s11, 1
    %p154 = por %p152, %p153
    %p155 = scmp.ne.s32.totalorder %s147, %s150
    %p156 = scmp.eq.s32.totalorder %s11, 0
    %p157 = por %p155, %p156
    %p158 = scmp.ne.s32.totalorder %s147, %s150
    %p159 = scmp.eq.s32.totalorder %s16, 1
    %p160 = por %p158, %p159
    %p161 = scmp.ne.s32.totalorder %s150, %s151
    %p162 = scmp.eq.s32.totalorder %s16, 0
    %p163 = por %p161, %p162
    %p164 = scmp.ne.s32.totalorder %s150, %s151
    %p165 = scmp.eq.s32.totalorder %s17, 1
    %p166 = por %p164, %p165
    %p168 = scmp.ne.s32.totalorder %s151, %s167
    %p169 = scmp.eq.s32.totalorder %s17, 0
    %p170 = por %p168, %p169
    %p171 = scmp.le.s32.totalorder 1, %s11
    %p172 = scmp.lt.s32.totalorder %s11, 3
    %p173 = pnand %p171, %p172
    %p174 = pneg %p173
    // Predicated region
    $region9: #{span_labeler_forward.2} parent=5 // pred_check
      _
    $region10: #{span_labeler_forward.2} parent=5 // pred_check_branch
      %176 = sbr.rel (%p173) target = $region12
    $region11: #{span_labeler_forward.2} parent=5 // pred_region
      %s177 = ssub.s32 %s11, 1
      // Predicated region
      $region13: #{span_labeler_forward.2} parent=11 // pred_check
        %p178 = pneg %p72
      $region14: #{span_labeler_forward.2} parent=11 // pred_check_branch
        %180 = sbr.rel (%p178) target = $region16
      $region15: #{span_labeler_forward.2} parent=11 // pred_region
        _
      $region16: #{span_labeler_forward.2} parent=11 // pred_fallthru
        _
      // Predicated region
      $region17: #{span_labeler_forward.2} parent=11 // pred_check
        %p181 = pneg %p93
      $region18: #{span_labeler_forward.2} parent=11 // pred_check_branch
        %183 = sbr.rel (%p181) target = $region20
      $region19: #{span_labeler_forward.2} parent=11 // pred_region
        _
      $region20: #{span_labeler_forward.2} parent=11 // pred_fallthru
        _
      // Predicated region
      $region21: #{span_labeler_forward.2} parent=11 // pred_check
        %p184 = pneg %p114
      $region22: #{span_labeler_forward.2} parent=11 // pred_check_branch
        %186 = sbr.rel (%p184) target = $region24
      $region23: #{span_labeler_forward.2} parent=11 // pred_region
        _
      $region24: #{span_labeler_forward.2} parent=11 // pred_fallthru
        _
      // Predicated region
      $region25: #{span_labeler_forward.2} parent=11 // pred_check
        %p187 = pneg %p135
      $region26: #{span_labeler_forward.2} parent=11 // pred_check_branch
        %189 = sbr.rel (%p187) target = $region28
      $region27: #{span_labeler_forward.2} parent=11 // pred_region
        _
      $region28: #{span_labeler_forward.2} parent=11 // pred_fallthru
        _
    $region12: #{span_labeler_forward.2} parent=5 // pred_fallthru
      _
    %p190 = scmp.lt.s32.totalorder %s11, 2
    // Predicated region
    $region29: #{span_labeler_forward.2} parent=5 // pred_check
      %p191 = pneg %p190
    $region30: #{span_labeler_forward.2} parent=5 // pred_check_branch
      %193 = sbr.rel (%p191) target = $region32
    $region31: #{span_labeler_forward.2} parent=5 // pred_region
      // Predicated region
      $region33: #{span_labeler_forward.2} parent=31 // pred_check
        %p194 = pneg %p45
      $region34: #{span_labeler_forward.2} parent=31 // pred_check_branch
        %196 = sbr.rel (%p194) target = $region36
      $region35: #{span_labeler_forward.2} parent=31 // pred_region
        %p197 = scmp.lt.s32.totalorder %s18, 1
        %s198 = scalar_select %p197, %s18, 1
        %p199 = scmp.lt.s32.totalorder %s19, 0
        %s200 = scalar_select %p199, %s19, 0
        %s201 = sadd.s32 %s200, %s198
        %s202 = smul.addr %s201, 8
        %s203 = scalar_lea.vmem %s0, %s202
      $region36: #{span_labeler_forward.2} parent=31 // pred_fallthru
        _
    $region32: #{span_labeler_forward.2} parent=5 // pred_fallthru
      _
    %p204 = scmp.le.s32.totalorder 1, %s11
    %p205 = scmp.lt.s32.totalorder %s11, 3
    %p206 = pnand %p204, %p205
    %p207 = pneg %p206
    // Predicated region
    $region37: #{span_labeler_forward.2} parent=5 // pred_check
      _
    $region38: #{span_labeler_forward.2} parent=5 // pred_check_branch
      %209 = sbr.rel (%p206) target = $region40
    $region39: #{span_labeler_forward.2} parent=5 // pred_region
      %s210 = ssub.s32 %s11, 1
      %p211 = scmp.lt.s32.totalorder %s20, 1
      %s212 = scalar_select %p211, %s20, 1
      %p213 = scmp.lt.s32.totalorder %s21, 0
      %s214 = scalar_select %p213, %s21, 0
      %s215 = sadd.s32 %s214, %s212
      %s216 = smul.addr %s215, 8
      %s217 = scalar_lea.vmem %s0, %s216
      %p218 = pneg %p51
      %p219 = pneg %p48
      %p220 = pneg %p72
      %p221 = pneg %p69
      %p222 = pneg %p93
      %p223 = pneg %p90
      %p224 = pneg %p114
      %p225 = pneg %p111
      %p226 = pneg %p135
      %p227 = pneg %p132
      %p228 = pneg %p163
      %p229 = pneg %p160
      %p230 = scmp.lt.s32.totalorder %s20, 1
      %s231 = scalar_select %p230, %s20, 1
      %p232 = scmp.lt.s32.totalorder %s21, 0
      %s233 = scalar_select %p232, %s21, 0
      %s234 = smul.addr %s231, 3
      %s235 = sadd.s32 %s233, %s234
      %s236 = smul.addr %s235, 8
      %s237 = scalar_lea.vmem %s5, %s236
      %p238 = scmp.lt.s32.totalorder %s20, 1
      %s239 = scalar_select %p238, %s20, 1
      %p240 = scmp.lt.s32.totalorder %s21, 0
      %s241 = scalar_select %p240, %s21, 0
      %s242 = sadd.s32 %s241, %s239
      %s243 = smul.addr %s242, 8
      %s244 = scalar_lea.vmem %s0, %s243
      %p245 = scmp.lt.s32.totalorder %s20, 1
      %s246 = scalar_select %p245, %s20, 1
      %p247 = scmp.lt.s32.totalorder %s21, 0
      %s248 = scalar_select %p247, %s21, 0
      %s249 = smul.addr %s246, 3
      %s250 = sadd.s32 %s248, %s249
      %s251 = smul.addr %s250, 8
      %s252 = scalar_lea.vmem %s5, %s251
      %v253 = vld [vmem:[%s244] sm:$0xff]
      %v254 = vld [vmem:[%s1] sm:$0xff]
      %v255 = vld [vmem:[%s1 + $0x8] sm:$0xff]
      %v256 = vld [vmem:[%s1 + $0x10] sm:$0xff]
      %v257 = vld [vmem:[%s1 + $0x18] sm:$0xff]
      %v258 = vld [vmem:[%s2] sm:$0x1]
      %v260 = vlaneseq
      %v261 = vshrl.u32 %v260, 7
      %v262 = vsub.s32 0, %v261
      %v263 = vrot.slane %v258, %v262
      %vm265 = vcmask 261120
      %v267 = vsel %vm265, %v253, 0
      %269 = vmatprep.subr.mxu0 0.0
      %270 = vmatpush1.msra.mxu0 0.0
      %271 = vmatprep.subr.mxu0 0.0
      %272 = vmatpush1.msra.mxu0 0.0
      %273 = vmatprep.subr.mxu0 0.0
      %274 = vmatpush1.msra.mxu0 0.0
      %275 = vmatprep.subr.mxu0 0.0
      %276 = vmatpush1.msra.mxu0 0.0
      %277 = vmatprep.subr.mxu0 0.0
      %278 = vmatpush1.msra.mxu0 0.0
      %279 = vmatprep.subr.mxu0 0.0
      %280 = vmatpush1.msra.mxu0 0.0
      %281 = vmatprep.subr.mxu0 0.0
      %282 = vmatpush1.msra.mxu0 0.0
      %283 = vmatprep.subr.mxu0 0.0
      %284 = vmatpush1.msra.mxu0 0.0
      %285 = vmatprep.subr.mxu0 0.0
      %286 = vmatpush1.msra.mxu0 0.0
      %287 = vmatprep.subr.mxu0 0.0
      %288 = vmatpush1.msra.mxu0 0.0
      %289 = vmatprep.subr.mxu0 0.0
      %290 = vmatpush1.msra.mxu0 0.0
      %291 = vmatprep.subr.mxu0 0.0
      %292 = vmatpush1.msra.mxu0 0.0
      %293 = vmatprep.subr.mxu0 0.0
      %294 = vmatpush1.msra.mxu0 %v257
      %295 = vmatprep.subr.mxu0 0.0
      %296 = vmatpush1.msra.mxu0 %v256
      %297 = vmatprep.subr.mxu0 0.0
      %298 = vmatpush1.msra.mxu0 %v255
      %299 = vmatprep.subr.mxu0 0.0
      %300 = vmatpush1.msra.mxu0 %v254
      %301 = vmatprep.subr.mxu0 0.0
      %302 = vmatpush2.msra.mxu0 0.0
      %303 = vmatprep.subr.mxu0 0.0
      %304 = vmatpush2.msra.mxu0 0.0
      %305 = vmatprep.subr.mxu0 0.0
      %306 = vmatpush2.msra.mxu0 0.0
      %307 = vmatprep.subr.mxu0 0.0
      %308 = vmatpush2.msra.mxu0 0.0
      %309 = vmatprep.subr.mxu0 0.0
      %310 = vmatpush2.msra.mxu0 0.0
      %311 = vmatprep.subr.mxu0 0.0
      %312 = vmatpush2.msra.mxu0 0.0
      %313 = vmatprep.subr.mxu0 0.0
      %314 = vmatpush2.msra.mxu0 0.0
      %315 = vmatprep.subr.mxu0 0.0
      %316 = vmatpush2.msra.mxu0 0.0
      %317 = vmatprep.subr.mxu0 0.0
      %318 = vmatpush2.msra.mxu0 0.0
      %319 = vmatprep.subr.mxu0 0.0
      %320 = vmatpush2.msra.mxu0 0.0
      %321 = vmatprep.subr.mxu0 0.0
      %322 = vmatpush2.msra.mxu0 0.0
      %323 = vmatprep.subr.mxu0 0.0
      %324 = vmatpush2.msra.mxu0 0.0
      %325 = vmatprep.subr.mxu0 0.0
      %326 = vmatpush2.msra.mxu0 0.0
      %327 = vmatprep.subr.mxu0 0.0
      %328 = vmatpush2.msra.mxu0 0.0
      %329 = vmatprep.subr.mxu0 0.0
      %330 = vmatpush2.msra.mxu0 0.0
      %331 = vmatprep.subr.mxu0 0.0
      %332 = vmatpush2.msra.mxu0 0.0
      %333 = vmatprep.mubr.f32.mxu0 0.0
      %334 = vmatmul.mubr.f32.gmra.mxu0 %v267
      %v335 = vpop.f32.mrf.mxu0
      %v336 = vadd.f32 %v263, %v335
      %v337 = vpop.f32.mrf.mxu0
      %338 = vdwg.mxu0
      %vm339 = vcmp.gt.f32.partialorder %v336, 0.0
      %v340 = vmul.f32 %v336, 0.1
      %v341 = vsel %vm339, %v336, %v340
      %v342 = vld [vmem:[%s3] sm:$0xff]
      %v343 = vld [vmem:[%s3 + $0x8] sm:$0xff]
      %v344 = vld [vmem:[%s3 + $0x10] sm:$0xff]
      %v345 = vld [vmem:[%s3 + $0x18] sm:$0xff]
      %v346 = vld [vmem:[%s3 + $0x20] sm:$0xff]
      %v347 = vld [vmem:[%s3 + $0x28] sm:$0xff]
      %v348 = vld [vmem:[%s3 + $0x30] sm:$0xff]
      %v349 = vld [vmem:[%s3 + $0x38] sm:$0xff]
      %v350 = vld [vmem:[%s4] sm:$0x1]
      %v352 = vlaneseq
      %v353 = vshrl.u32 %v352, 7
      %v354 = vsub.s32 0, %v353
      %v355 = vrot.slane %v350, %v354
      %vm357 = vcmask 523264
      %v359 = vsel %vm357, %v341, 0
      %361 = vmatprep.subr.mxu0 0.0
      %362 = vmatpush1.msra.mxu0 0.0
      %363 = vmatprep.subr.mxu0 0.0
      %364 = vmatpush1.msra.mxu0 0.0
      %365 = vmatprep.subr.mxu0 0.0
      %366 = vmatpush1.msra.mxu0 0.0
      %367 = vmatprep.subr.mxu0 0.0
      %368 = vmatpush1.msra.mxu0 0.0
      %369 = vmatprep.subr.mxu0 0.0
      %370 = vmatpush1.msra.mxu0 0.0
      %371 = vmatprep.subr.mxu0 0.0
      %372 = vmatpush1.msra.mxu0 0.0
      %373 = vmatprep.subr.mxu0 0.0
      %374 = vmatpush1.msra.mxu0 0.0
      %375 = vmatprep.subr.mxu0 0.0
      %376 = vmatpush1.msra.mxu0 0.0
      %377 = vmatprep.subr.mxu0 0.0
      %378 = vmatpush1.msra.mxu0 %v349
      %379 = vmatprep.subr.mxu0 0.0
      %380 = vmatpush1.msra.mxu0 %v348
      %381 = vmatprep.subr.mxu0 0.0
      %382 = vmatpush1.msra.mxu0 %v347
      %383 = vmatprep.subr.mxu0 0.0
      %384 = vmatpush1.msra.mxu0 %v346
      %385 = vmatprep.subr.mxu0 0.0
      %386 = vmatpush1.msra.mxu0 %v345
      %387 = vmatprep.subr.mxu0 0.0
      %388 = vmatpush1.msra.mxu0 %v344
      %389 = vmatprep.subr.mxu0 0.0
      %390 = vmatpush1.msra.mxu0 %v343
      %391 = vmatprep.subr.mxu0 0.0
      %392 = vmatpush1.msra.mxu0 %v342
      %393 = vmatprep.subr.mxu0 0.0
      %394 = vmatpush2.msra.mxu0 0.0
      %395 = vmatprep.subr.mxu0 0.0
      %396 = vmatpush2.msra.mxu0 0.0
      %397 = vmatprep.subr.mxu0 0.0
      %398 = vmatpush2.msra.mxu0 0.0
      %399 = vmatprep.subr.mxu0 0.0
      %400 = vmatpush2.msra.mxu0 0.0
      %401 = vmatprep.subr.mxu0 0.0
      %402 = vmatpush2.msra.mxu0 0.0
      %403 = vmatprep.subr.mxu0 0.0
      %404 = vmatpush2.msra.mxu0 0.0
      %405 = vmatprep.subr.mxu0 0.0
      %406 = vmatpush2.msra.mxu0 0.0
      %407 = vmatprep.subr.mxu0 0.0
      %408 = vmatpush2.msra.mxu0 0.0
      %409 = vmatprep.subr.mxu0 0.0
      %410 = vmatpush2.msra.mxu0 0.0
      %411 = vmatprep.subr.mxu0 0.0
      %412 = vmatpush2.msra.mxu0 0.0
      %413 = vmatprep.subr.mxu0 0.0
      %414 = vmatpush2.msra.mxu0 0.0
      %415 = vmatprep.subr.mxu0 0.0
      %416 = vmatpush2.msra.mxu0 0.0
      %417 = vmatprep.subr.mxu0 0.0
      %418 = vmatpush2.msra.mxu0 0.0
      %419 = vmatprep.subr.mxu0 0.0
      %420 = vmatpush2.msra.mxu0 0.0
      %421 = vmatprep.subr.mxu0 0.0
      %422 = vmatpush2.msra.mxu0 0.0
      %423 = vmatprep.subr.mxu0 0.0
      %424 = vmatpush2.msra.mxu0 0.0
      %425 = vmatprep.mubr.f32.mxu0 0.0
      %426 = vmatmul.mubr.f32.gmra.mxu0 %v359
      %v427 = vpop.f32.mrf.mxu0
      %v428 = vadd.f32 %v355, %v427
      %v429 = vpop.f32.mrf.mxu0
      %430 = vdwg.mxu0
      %431 = vxpose.xlu0.b32.start [1/16] %v428, 128
      %432 = vxpose.xlu0.b32.cont [2/16] 0.0, 128
      %433 = vxpose.xlu0.b32.cont [3/16] 0.0, 128
      %434 = vxpose.xlu0.b32.cont [4/16] 0.0, 128
      %435 = vxpose.xlu0.b32.cont [5/16] 0.0, 128
      %436 = vxpose.xlu0.b32.cont [6/16] 0.0, 128
      %437 = vxpose.xlu0.b32.cont [7/16] 0.0, 128
      %438 = vxpose.xlu0.b32.cont [8/16] 0.0, 128
      %439 = vxpose.xlu0.b32.cont [9/16] 0.0, 128
      %440 = vxpose.xlu0.b32.cont [10/16] 0.0, 128
      %441 = vxpose.xlu0.b32.cont [11/16] 0.0, 128
      %442 = vxpose.xlu0.b32.cont [12/16] 0.0, 128
      %443 = vxpose.xlu0.b32.cont [13/16] 0.0, 128
      %444 = vxpose.xlu0.b32.cont [14/16] 0.0, 128
      %445 = vxpose.xlu0.b32.cont [15/16] 0.0, 128
      %446 = vxpose.xlu0.b32.end [16/16] 0.0, 128
      %v447 = vpop.trf.xlu0
      %v448 = vpop.trf.xlu0
      %v449 = vpop.trf.xlu0
      %v450 = vpop.trf.xlu0
      %v451 = vpop.trf.xlu0
      %v452 = vpop.trf.xlu0
      %v453 = vpop.trf.xlu0
      %v454 = vpop.trf.xlu0
      %v455 = vpop.trf.xlu0
      %v456 = vpop.trf.xlu0
      %v457 = vpop.trf.xlu0
      %v458 = vpop.trf.xlu0
      %v459 = vpop.trf.xlu0
      %v460 = vpop.trf.xlu0
      %v461 = vpop.trf.xlu0
      %v462 = vpop.trf.xlu0
      %vm463 = vcmask 64512
      %464 = vst.msk [vmem:[%s252] sm:$0xff] %vm463, %v447
      %465 = vst.msk [vmem:[%s252 + $0x8] sm:$0xff] %vm463, %v448
      %466 = vst.msk [vmem:[%s252 + $0x10] sm:$0xff] %vm463, %v449
      %p467 = scmp.lt.s32.totalorder %s20, 1
      %s468 = scalar_select %p467, %s20, 1
      %p469 = scmp.lt.s32.totalorder %s21, 0
      %s470 = scalar_select %p469, %s21, 0
      %s471 = smul.addr %s468, 3
      %s472 = sadd.s32 %s470, %s471
      %s473 = smul.addr %s472, 8
      %s474 = scalar_lea.vmem %s5, %s473
      // Predicated region
      $region41: #{span_labeler_forward.2} parent=39 // pred_check
        %p475 = pneg %p160
      $region42: #{span_labeler_forward.2} parent=39 // pred_check_branch
        %477 = sbr.rel (%p475) target = $region44
      $region43: #{span_labeler_forward.2} parent=39 // pred_region
        _
      $region44: #{span_labeler_forward.2} parent=39 // pred_fallthru
        _
    $region40: #{span_labeler_forward.2} parent=5 // pred_fallthru
      _
    %p478 = scmp.le.s32.totalorder 2, %s11
    // Predicated region
    $region45: #{span_labeler_forward.2} parent=5 // pred_check
      %p479 = pneg %p478
    $region46: #{span_labeler_forward.2} parent=5 // pred_check_branch
      %481 = sbr.rel (%p479) target = $region48
    $region47: #{span_labeler_forward.2} parent=5 // pred_region
      %s482 = ssub.s32 %s11, 2
      // Predicated region
      $region49: #{span_labeler_forward.2} parent=47 // pred_check
        %p483 = pneg %p166
      $region50: #{span_labeler_forward.2} parent=47 // pred_check_branch
        %485 = sbr.rel (%p483) target = $region52
      $region51: #{span_labeler_forward.2} parent=47 // pred_region
        %p486 = scmp.lt.s32.totalorder %s22, 1
        %s487 = scalar_select %p486, %s22, 1
        %p488 = scmp.lt.s32.totalorder %s23, 0
        %s489 = scalar_select %p488, %s23, 0
        %s490 = smul.addr %s487, 3
        %s491 = sadd.s32 %s489, %s490
        %s492 = smul.addr %s491, 8
        %s493 = scalar_lea.vmem %s5, %s492
      $region52: #{span_labeler_forward.2} parent=47 // pred_fallthru
        _
    $region48: #{span_labeler_forward.2} parent=5 // pred_fallthru
      _
  $region6: #{span_labeler_forward.2} parent=0 // loop_footer
    %s15 = sadd.s32 1, %s11
  $region7: #{span_labeler_forward.2} parent=0 // loop_footer_branch
    %10 = sbr.rel target = $region3
  $region8: #{span_labeler_forward.2} parent=0 // loop_exit
    _

// kernel: span_labeler_forward.3
$region0: #{span_labeler_forward.3}
  #allocation0 [shape = 'u32[]', space=smem, size = 0x4, offset = 0x4, fixed_abs, tag = 'smem constant byte address 0x4 - core index']
  #allocation1 [shape = 'u32[144,128]{1,0:T(1,128)}', space=vmem, size = 0x12000, scoped, tag = 'internal scratch']
  %s0 = inlined_call_operand.vmem [shape: f32[2,8,8], index: 0, kind: input, shape index: {}]
  %s1 = inlined_call_operand.vmem [shape: f32[2,8,8], index: 1, kind: input, shape index: {}]
  %s2 = inlined_call_operand.vmem [shape: f32[2,8,8], index: 2, kind: input, shape index: {}]
  %s3 = inlined_call_operand.vmem [shape: f32[2,8,8], index: 3, kind: input, shape index: {}]
  %s4 = inlined_call_operand.hbm [shape: f32[2,8,8,8], index: 4, kind: output, shape index: {}]
  %s5 = sld [smem:[#allocation0]]
  $region49: #{span_labeler_forward.3} parent=0
    _
  %s7 = ssub.s32 1, %s5
  %s8 = scalar_select 0, %s7, %s5
  $region1: #{span_labeler_forward.3} parent=0
    #allocation2 [shape = 'u8[65536]{0}', space=vmem, size = 0x10000, scoped, tag = 'output window, operand 0']
    #allocation3 [shape = 's32[2]{0}', space=sflag, size = 0x8, scoped, tag = 'scoped memory for span_labeler_forward.3']
    %9 = vsyncpa [#allocation3], 0
    %s10 = scalar_lea.sflag [#allocation3], 1
    %11 = vsyncpa %s10, 0
    loop: start=0, step=1, limit=4
    $region2: #{span_labeler_forward.3} parent=1 // loop_pre_header
      _
    $region3: #{span_labeler_forward.3} parent=1 // loop_header
      %s13 = sphi 0, %s17
      %p14 = scmp.ge.s32.totalorder %s13, 4
      %s20 = sphi 0, %s46
      %s21 = sphi 0, %s42
      %s22 = sphi 0, %s38
      %s23 = sphi 0, %s34
      %s24 = sphi 0, %s20
      %s25 = sphi 0, %s21
      %s26 = sphi 0, %s22
      %s27 = sphi 0, %s23
      %s28 = sphi 0, %s24
      %s29 = sphi 0, %s25
      %s30 = sphi 0, %s26
      %s31 = sphi 0, %s27
      %s53 = sphi 0, %s55
      %s56 = sphi 0, %s53
      %s57 = sphi 0, %s56
      %s73 = sphi 0, %s57
      %s83 = sphi 0, %s85
      %s86 = sphi 0, %s83
      %s87 = sphi 0, %s86
      %s103 = sphi 0, %s87
      %s113 = sphi 0, %s115
      %s116 = sphi 0, %s113
      %s117 = sphi 0, %s116
      %s133 = sphi 0, %s117
      %s143 = sphi 0, %s145
      %s146 = sphi 0, %s143
      %s147 = sphi 0, %s146
      %s163 = sphi 0, %s147
      %s175 = sphi 0, %s177
      %s178 = sphi 0, %s175
      %s179 = sphi 0, %s178
      %s195 = sphi 0, %s179
    $region4: #{span_labeler_forward.3} parent=1 // loop_header_branch
      %16 = sbr.rel (%p14) target = $region8
    $region5: #{span_labeler_forward.3} parent=1 // loop_body
      %s18 = ssub.s32 %s13, 1
      %s19 = ssub.s32 %s13, 2
      %s32 = sadd.s32 1, %s23
      %p33 = scmp.ge.s32.totalorder %s32, 1
      %s34 = scalar_select %p33, 0, %s32
      %s35 = sadd.s32 1, %s22
      %s36 = scalar_select %p33, %s35, %s22
      %p37 = scmp.ge.s32.totalorder %s36, 1
      %s38 = scalar_select %p37, 0, %s36
      %s39 = sadd.s32 1, %s21
      %s40 = scalar_select %p37, %s39, %s21
      %p41 = scmp.ge.s32.totalorder %s40, 1
      %s42 = scalar_select %p41, 0, %s40
      %s43 = sadd.s32 1, %s20
      %s44 = scalar_select %p41, %s43, %s20
      %p45 = scmp.ge.s32.totalorder %s44, 2
      %s46 = scalar_select %p45, 0, %s44
      %s47 = ssub.s32 %s20, %s46
      %s48 = ssub.s32 %s21, %s42
      %s49 = sor.u32 %s47, %s48
      %s50 = ssub.s32 %s23, %s34
      %s51 = sor.u32 %s49, %s50
      %p52 = scmp.eq.s32.totalorder %s51, 0
      %s54 = sadd.s32 %s53, 1
      %s55 = scalar_select %p52, %s53, %s54
      %p58 = pneg %p52
      %p59 = scmp.eq.s32.totalorder %s13, 1
      %p60 = por %p58, %p59
      %p61 = scmp.ne.s32.totalorder %s53, %s56
      %p62 = scmp.eq.s32.totalorder %s13, 0
      %p63 = por %p61, %p62
      %p64 = scmp.ne.s32.totalorder %s53, %s56
      %p65 = scmp.eq.s32.totalorder %s18, 1
      %p66 = por %p64, %p65
      %p67 = scmp.ne.s32.totalorder %s56, %s57
      %p68 = scmp.eq.s32.totalorder %s18, 0
      %p69 = por %p67, %p68
      %p70 = scmp.ne.s32.totalorder %s56, %s57
      %p71 = scmp.eq.s32.totalorder %s19, 1
      %p72 = por %p70, %p71
      %p74 = scmp.ne.s32.totalorder %s57, %s73
      %p75 = scmp.eq.s32.totalorder %s19, 0
      %p76 = por %p74, %p75
      %s77 = ssub.s32 %s20, %s46
      %s78 = ssub.s32 %s21, %s42
      %s79 = sor.u32 %s77, %s78
      %s80 = ssub.s32 %s22, %s38
      %s81 = sor.u32 %s79, %s80
      %p82 = scmp.eq.s32.totalorder %s81, 0
      %s84 = sadd.s32 %s83, 1
      %s85 = scalar_select %p82, %s83, %s84
      %p88 = pneg %p82
      %p89 = scmp.eq.s32.totalorder %s13, 1
      %p90 = por %p88, %p89
      %p91 = scmp.ne.s32.totalorder %s83, %s86
      %p92 = scmp.eq.s32.totalorder %s13, 0
      %p93 = por %p91, %p92
      %p94 = scmp.ne.s32.totalorder %s83, %s86
      %p95 = scmp.eq.s32.totalorder %s18, 1
      %p96 = por %p94, %p95
      %p97 = scmp.ne.s32.totalorder %s86, %s87
      %p98 = scmp.eq.s32.totalorder %s18, 0
      %p99 = por %p97, %p98
      %p100 = scmp.ne.s32.totalorder %s86, %s87
      %p101 = scmp.eq.s32.totalorder %s19, 1
      %p102 = por %p100, %p101
      %p104 = scmp.ne.s32.totalorder %s87, %s103
      %p105 = scmp.eq.s32.totalorder %s19, 0
      %p106 = por %p104, %p105
      %s107 = ssub.s32 %s20, %s46
      %s108 = ssub.s32 %s21, %s42
      %s109 = sor.u32 %s107, %s108
      %s110 = ssub.s32 %s23, %s34
      %s111 = sor.u32 %s109, %s110
      %p112 = scmp.eq.s32.totalorder %s111, 0
      %s114 = sadd.s32 %s113, 1
      %s115 = scalar_select %p112, %s113, %s114
      %p118 = pneg %p112
      %p119 = scmp.eq.s32.totalorder %s13, 1
      %p120 = por %p118, %p119
      %p121 = scmp.ne.s32.totalorder %s113, %s116
      %p122 = scmp.eq.s32.totalorder %s13, 0
      %p123 = por %p121, %p122
      %p124 = scmp.ne.s32.totalorder %s113, %s116
      %p125 = scmp.eq.s32.totalorder %s18, 1
      %p126 = por %p124, %p125
      %p127 = scmp.ne.s32.totalorder %s116, %s117
      %p128 = scmp.eq.s32.totalorder %s18, 0
      %p129 = por %p127, %p128
      %p130 = scmp.ne.s32.totalorder %s116, %s117
      %p131 = scmp.eq.s32.totalorder %s19, 1
      %p132 = por %p130, %p131
      %p134 = scmp.ne.s32.totalorder %s117, %s133
      %p135 = scmp.eq.s32.totalorder %s19, 0
      %p136 = por %p134, %p135
      %s137 = ssub.s32 %s20, %s46
      %s138 = ssub.s32 %s21, %s42
      %s139 = sor.u32 %s137, %s138
      %s140 = ssub.s32 %s22, %s38
      %s141 = sor.u32 %s139, %s140
      %p142 = scmp.eq.s32.totalorder %s141, 0
      %s144 = sadd.s32 %s143, 1
      %s145 = scalar_select %p142, %s143, %s144
      %p148 = pneg %p142
      %p149 = scmp.eq.s32.totalorder %s13, 1
      %p150 = por %p148, %p149
      %p151 = scmp.ne.s32.totalorder %s143, %s146
      %p152 = scmp.eq.s32.totalorder %s13, 0
      %p153 = por %p151, %p152
      %p154 = scmp.ne.s32.totalorder %s143, %s146
      %p155 = scmp.eq.s32.totalorder %s18, 1
      %p156 = por %p154, %p155
      %p157 = scmp.ne.s32.totalorder %s146, %s147
      %p158 = scmp.eq.s32.totalorder %s18, 0
      %p159 = por %p157, %p158
      %p160 = scmp.ne.s32.totalorder %s146, %s147
      %p161 = scmp.eq.s32.totalorder %s19, 1
      %p162 = por %p160, %p161
      %p164 = scmp.ne.s32.totalorder %s147, %s163
      %p165 = scmp.eq.s32.totalorder %s19, 0
      %p166 = por %p164, %p165
      %s167 = ssub.s32 %s20, %s46
      %s168 = ssub.s32 %s21, %s42
      %s169 = sor.u32 %s167, %s168
      %s170 = ssub.s32 %s22, %s38
      %s171 = sor.u32 %s169, %s170
      %s172 = ssub.s32 %s23, %s34
      %s173 = sor.u32 %s171, %s172
      %p174 = scmp.eq.s32.totalorder %s173, 0
      %s176 = sadd.s32 %s175, 1
      %s177 = scalar_select %p174, %s175, %s176
      %p180 = pneg %p174
      %p181 = scmp.eq.s32.totalorder %s13, 1
      %p182 = por %p180, %p181
      %p183 = scmp.ne.s32.totalorder %s175, %s178
      %p184 = scmp.eq.s32.totalorder %s13, 0
      %p185 = por %p183, %p184
      %p186 = scmp.ne.s32.totalorder %s175, %s178
      %p187 = scmp.eq.s32.totalorder %s18, 1
      %p188 = por %p186, %p187
      %p189 = scmp.ne.s32.totalorder %s178, %s179
      %p190 = scmp.eq.s32.totalorder %s18, 0
      %p191 = por %p189, %p190
      %p192 = scmp.ne.s32.totalorder %s178, %s179
      %p193 = scmp.eq.s32.totalorder %s19, 1
      %p194 = por %p192, %p193
      %p196 = scmp.ne.s32.totalorder %s179, %s195
      %p197 = scmp.eq.s32.totalorder %s19, 0
      %p198 = por %p196, %p197
      %p199 = scmp.le.s32.totalorder 1, %s13
      %p200 = scmp.lt.s32.totalorder %s13, 3
      %p201 = pnand %p199, %p200
      %p202 = pneg %p201
      // Predicated region
      $region9: #{span_labeler_forward.3} parent=5 // pred_check
        _
      $region10: #{span_labeler_forward.3} parent=5 // pred_check_branch
        %204 = sbr.rel (%p201) target = $region12
      $region11: #{span_labeler_forward.3} parent=5 // pred_region
        %s205 = ssub.s32 %s13, 1
      $region12: #{span_labeler_forward.3} parent=5 // pred_fallthru
        _
      %p206 = scmp.lt.s32.totalorder %s13, 2
      // Predicated region
      $region13: #{span_labeler_forward.3} parent=5 // pred_check
        %p207 = pneg %p206
      $region14: #{span_labeler_forward.3} parent=5 // pred_check_branch
        %209 = sbr.rel (%p207) target = $region16
      $region15: #{span_labeler_forward.3} parent=5 // pred_region
        // Predicated region
        $region17: #{span_labeler_forward.3} parent=15 // pred_check
          %p210 = pneg %p63
        $region18: #{span_labeler_forward.3} parent=15 // pred_check_branch
          %212 = sbr.rel (%p210) target = $region20
        $region19: #{span_labeler_forward.3} parent=15 // pred_region
          %p213 = scmp.lt.s32.totalorder %s20, 1
          %s214 = scalar_select %p213, %s20, 1
          %p215 = scmp.lt.s32.totalorder %s21, 0
          %s216 = scalar_select %p215, %s21, 0
          %p217 = scmp.lt.s32.totalorder %s23, 0
          %s218 = scalar_select %p217, %s23, 0
          %s219 = sadd.s32 %s218, %s216
          %s220 = sadd.s32 %s219, %s214
          %s221 = smul.addr %s220, 8
          %s222 = scalar_lea.vmem %s0, %s221
        $region20: #{span_labeler_forward.3} parent=15 // pred_fallthru
          _
        // Predicated region
        $region21: #{span_labeler_forward.3} parent=15 // pred_check
          %p223 = pneg %p93
        $region22: #{span_labeler_forward.3} parent=15 // pred_check_branch
          %225 = sbr.rel (%p223) target = $region24
        $region23: #{span_labeler_forward.3} parent=15 // pred_region
          %p226 = scmp.lt.s32.totalorder %s20, 1
          %s227 = scalar_select %p226, %s20, 1
          %p228 = scmp.lt.s32.totalorder %s21, 0
          %s229 = scalar_select %p228, %s21, 0
          %p230 = scmp.lt.s32.totalorder %s22, 0
          %s231 = scalar_select %p230, %s22, 0
          %s232 = sadd.s32 %s231, %s229
          %s233 = sadd.s32 %s232, %s227
          %s234 = smul.addr %s233, 8
          %s235 = scalar_lea.vmem %s1, %s234
        $region24: #{span_labeler_forward.3} parent=15 // pred_fallthru
          _
        // Predicated region
        $region25: #{span_labeler_forward.3} parent=15 // pred_check
          %p236 = pneg %p123
        $region26: #{span_labeler_forward.3} parent=15 // pred_check_branch
          %238 = sbr.rel (%p236) target = $region28
        $region27: #{span_labeler_forward.3} parent=15 // pred_region
          %p239 = scmp.lt.s32.totalorder %s20, 1
          %s240 = scalar_select %p239, %s20, 1
          %p241 = scmp.lt.s32.totalorder %s21, 0
          %s242 = scalar_select %p241, %s21, 0
          %p243 = scmp.lt.s32.totalorder %s23, 0
          %s244 = scalar_select %p243, %s23, 0
          %s245 = sadd.s32 %s244, %s242
          %s246 = sadd.s32 %s245, %s240
          %s247 = smul.addr %s246, 8
          %s248 = scalar_lea.vmem %s2, %s247
        $region28: #{span_labeler_forward.3} parent=15 // pred_fallthru
          _
        // Predicated region
        $region29: #{span_labeler_forward.3} parent=15 // pred_check
          %p249 = pneg %p153
        $region30: #{span_labeler_forward.3} parent=15 // pred_check_branch
          %251 = sbr.rel (%p249) target = $region32
        $region31: #{span_labeler_forward.3} parent=15 // pred_region
          %p252 = scmp.lt.s32.totalorder %s20, 1
          %s253 = scalar_select %p252, %s20, 1
          %p254 = scmp.lt.s32.totalorder %s21, 0
          %s255 = scalar_select %p254, %s21, 0
          %p256 = scmp.lt.s32.totalorder %s22, 0
          %s257 = scalar_select %p256, %s22, 0
          %s258 = sadd.s32 %s257, %s255
          %s259 = sadd.s32 %s258, %s253
          %s260 = smul.addr %s259, 8
          %s261 = scalar_lea.vmem %s3, %s260
        $region32: #{span_labeler_forward.3} parent=15 // pred_fallthru
          _
      $region16: #{span_labeler_forward.3} parent=5 // pred_fallthru
        _
      %p262 = scmp.le.s32.totalorder 1, %s13
      %p263 = scmp.lt.s32.totalorder %s13, 3
      %p264 = pnand %p262, %p263
      %p265 = pneg %p264
      // Predicated region
      $region33: #{span_labeler_forward.3} parent=5 // pred_check
        _
      $region34: #{span_labeler_forward.3} parent=5 // pred_check_branch
        %267 = sbr.rel (%p264) target = $region36
      $region35: #{span_labeler_forward.3} parent=5 // pred_region
        %s268 = ssub.s32 %s13, 1
        %p269 = scmp.lt.s32.totalorder %s24, 1
        %s270 = scalar_select %p269, %s24, 1
        %p271 = scmp.lt.s32.totalorder %s25, 0
        %s272 = scalar_select %p271, %s25, 0
        %p273 = scmp.lt.s32.totalorder %s27, 0
        %s274 = scalar_select %p273, %s27, 0
        %s275 = sadd.s32 %s274, %s272
        %s276 = sadd.s32 %s275, %s270
        %s277 = smul.addr %s276, 8
        %s278 = scalar_lea.vmem %s0, %s277
        %p279 = pneg %p69
        %p280 = pneg %p66
        %p281 = scmp.lt.s32.totalorder %s24, 1
        %s282 = scalar_select %p281, %s24, 1
        %p283 = scmp.lt.s32.totalorder %s25, 0
        %s284 = scalar_select %p283, %s25, 0
        %p285 = scmp.lt.s32.totalorder %s26, 0
        %s286 = scalar_select %p285, %s26, 0
        %s287 = sadd.s32 %s286, %s284
        %s288 = sadd.s32 %s287, %s282
        %s289 = smul.addr %s288, 8
        %s290 = scalar_lea.vmem %s1, %s289
        %p291 = pneg %p99
        %p292 = pneg %p96
        %p293 = scmp.lt.s32.totalorder %s24, 1
        %s294 = scalar_select %p293, %s24, 1
        %p295 = scmp.lt.s32.totalorder %s25, 0
        %s296 = scalar_select %p295, %s25, 0
        %p297 = scmp.lt.s32.totalorder %s27, 0
        %s298 = scalar_select %p297, %s27, 0
        %s299 = sadd.s32 %s298, %s296
        %s300 = sadd.s32 %s299, %s294
        %s301 = smul.addr %s300, 8
        %s302 = scalar_lea.vmem %s2, %s301
        %p303 = pneg %p129
        %p304 = pneg %p126
        %p305 = scmp.lt.s32.totalorder %s24, 1
        %s306 = scalar_select %p305, %s24, 1
        %p307 = scmp.lt.s32.totalorder %s25, 0
        %s308 = scalar_select %p307, %s25, 0
        %p309 = scmp.lt.s32.totalorder %s26, 0
        %s310 = scalar_select %p309, %s26, 0
        %s311 = sadd.s32 %s310, %s308
        %s312 = sadd.s32 %s311, %s306
        %s313 = smul.addr %s312, 8
        %s314 = scalar_lea.vmem %s3, %s313
        %p315 = pneg %p159
        %p316 = pneg %p156
        %p317 = pneg %p191
        %p318 = pneg %p188
        %s319 = sand.u32 %s178, 1
        %s320 = scalar_lea.sflag [#allocation3], %s319
        %s321 = sand.u32 %s178, 1
        %s322 = smul.addr %s321, 64
        %s323 = scalar_lea.vmem [#allocation2], %s322
        %p324 = scmp.lt.s32.totalorder %s24, 1
        %s325 = scalar_select %p324, %s24, 1
        %p326 = scmp.lt.s32.totalorder %s25, 0
        %s327 = scalar_select %p326, %s25, 0
        %p328 = scmp.lt.s32.totalorder %s27, 0
        %s329 = scalar_select %p328, %s27, 0
        %s330 = sadd.s32 %s329, %s327
        %s331 = sadd.s32 %s330, %s325
        %s332 = smul.addr %s331, 8
        %s333 = scalar_lea.vmem %s0, %s332
        %p334 = scmp.lt.s32.totalorder %s24, 1
        %s335 = scalar_select %p334, %s24, 1
        %p336 = scmp.lt.s32.totalorder %s25, 0
        %s337 = scalar_select %p336, %s25, 0
        %p338 = scmp.lt.s32.totalorder %s26, 0
        %s339 = scalar_select %p338, %s26, 0
        %s340 = sadd.s32 %s339, %s337
        %s341 = sadd.s32 %s340, %s335
        %s342 = smul.addr %s341, 8
        %s343 = scalar_lea.vmem %s1, %s342
        %p344 = scmp.lt.s32.totalorder %s24, 1
        %s345 = scalar_select %p344, %s24, 1
        %p346 = scmp.lt.s32.totalorder %s25, 0
        %s347 = scalar_select %p346, %s25, 0
        %p348 = scmp.lt.s32.totalorder %s27, 0
        %s349 = scalar_select %p348, %s27, 0
        %s350 = sadd.s32 %s349, %s347
        %s351 = sadd.s32 %s350, %s345
        %s352 = smul.addr %s351, 8
        %s353 = scalar_lea.vmem %s2, %s352
        %p354 = scmp.lt.s32.totalorder %s24, 1
        %s355 = scalar_select %p354, %s24, 1
        %p356 = scmp.lt.s32.totalorder %s25, 0
        %s357 = scalar_select %p356, %s25, 0
        %p358 = scmp.lt.s32.totalorder %s26, 0
        %s359 = scalar_select %p358, %s26, 0
        %s360 = sadd.s32 %s359, %s357
        %s361 = sadd.s32 %s360, %s355
        %s362 = smul.addr %s361, 8
        %s363 = scalar_lea.vmem %s3, %s362
        %s364 = smul.u32 8, %s25
        %v365 = vld [vmem:[%s333] sm:$0xff]
        %v366 = vld [vmem:[%s353] sm:$0xff]
        %v367 = vld [vmem:[%s343] sm:$0xff]
        %v368 = vld [vmem:[%s363] sm:$0xff]
        %s369 = smul.u32 %s26, 8
        %s370 = smul.u32 %s27, 8
        %v371 = vlaneseq
        %v372 = vand.u32 %v371, 127
        %v373 = vstv %s370
        %v374 = vadd.s32 %v372, %v373
        %v375 = vlaneseq
        %v376 = vshrl.u32 %v375, 7
        %v377 = vstv %s369
        %v378 = vadd.s32 %v376, %v377
        %v379 = vsub.s32 %v374, %v378
        %v380 = vadd.s32 %v379, 1
        %v381 = vcvt.s32.f32 %v380
        %vm382 = vcmp.eq.s32.totalorder %v380, 0
        %v383 = vrcp.pop %v381
        %v384 = vmul.f32 1.0, %v383
        %v385 = vsel %vm382, 0.0, %v384
        %v387 = vcombine.high %v365, %v365
        %v389 = vunpack.c.l.s4 1966171168
        %v390 = vunpack.c.0.s8 %v389
        %v391 = vlaneseq
        %v392 = vshrl.u32 %v391, 7
        %v393 = vsub.s32 %v390, %v392
        %v394 = vrot.slane %v365, %v393
        %v396 = vunpack.c.l.s4 1966171168
        %v397 = vunpack.c.0.s8 %v396
        %v398 = vlaneseq
        %v399 = vshrl.u32 %v398, 7
        %v400 = vsub.s32 %v397, %v399
        %v401 = vrot.slane %v387, %v400
        %v402 = vcombine.high %v394, %v394
        %v403 = vcombine.high %v401, %v401
        %v405 = vunpack.c.l.s4 1966171168
        %v406 = vunpack.c.0.s8 %v405
        %v407 = vlaneseq
        %v408 = vshrl.u32 %v407, 7
        %v409 = vsub.s32 %v406, %v408
        %v410 = vrot.slane %v394, %v409
        %v412 = vunpack.c.l.s4 1966171168
        %v413 = vunpack.c.0.s8 %v412
        %v414 = vlaneseq
        %v415 = vshrl.u32 %v414, 7
        %v416 = vsub.s32 %v413, %v415
        %v417 = vrot.slane %v401, %v416
        %v419 = vunpack.c.l.s4 1966171168
        %v420 = vunpack.c.0.s8 %v419
        %v421 = vlaneseq
        %v422 = vshrl.u32 %v421, 7
        %v423 = vsub.s32 %v420, %v422
        %v424 = vrot.slane %v402, %v423
        %v426 = vunpack.c.l.s4 1966171168
        %v427 = vunpack.c.0.s8 %v426
        %v428 = vlaneseq
        %v429 = vshrl.u32 %v428, 7
        %v430 = vsub.s32 %v427, %v429
        %v431 = vrot.slane %v403, %v430
        %v432 = vcombine.high %v410, %v410
        %v433 = vcombine.high %v417, %v417
        %v434 = vcombine.high %v424, %v424
        %v435 = vcombine.high %v431, %v431
        %v436 = vlaneseq
        %v437 = vshrl.u32 %v436, 7
        %v438 = vsub.s32 0, %v437
        %v439 = vrot.slane %v367, %v438
        %441 = vbcast.lane.b32.xlu0 %v439, 256
        %v442 = vpop.permute.xlu0 %441
        %v443 = vlaneseq
        %v444 = vshrl.u32 %v443, 7
        %v445 = vsub.s32 1, %v444
        %v446 = vrot.slane %v367, %v445
        %448 = vbcast.lane.b32.xlu0 %v446, 256
        %v449 = vpop.permute.xlu0 %448
        %v450 = vlaneseq
        %v451 = vshrl.u32 %v450, 7
        %v452 = vsub.s32 2, %v451
        %v453 = vrot.slane %v367, %v452
        %455 = vbcast.lane.b32.xlu0 %v453, 256
        %v456 = vpop.permute.xlu0 %455
        %v457 = vlaneseq
        %v458 = vshrl.u32 %v457, 7
        %v459 = vsub.s32 3, %v458
        %v460 = vrot.slane %v367, %v459
        %462 = vbcast.lane.b32.xlu0 %v460, 256
        %v463 = vpop.permute.xlu0 %462
        %v464 = vlaneseq
        %v465 = vshrl.u32 %v464, 7
        %v466 = vsub.s32 4, %v465
        %v467 = vrot.slane %v367, %v466
        %469 = vbcast.lane.b32.xlu0 %v467, 256
        %v470 = vpop.permute.xlu0 %469
        %v471 = vlaneseq
        %v472 = vshrl.u32 %v471, 7
        %v473 = vsub.s32 5, %v472
        %v474 = vrot.slane %v367, %v473
        %476 = vbcast.lane.b32.xlu0 %v474, 256
        %v477 = vpop.permute.xlu0 %476
        %v478 = vlaneseq
        %v479 = vshrl.u32 %v478, 7
        %v480 = vsub.s32 6, %v479
        %v481 = vrot.slane %v367, %v480
        %483 = vbcast.lane.b32.xlu0 %v481, 256
        %v484 = vpop.permute.xlu0 %483
        %v485 = vlaneseq
        %v486 = vshrl.u32 %v485, 7
        %v487 = vsub.s32 7, %v486
        %v488 = vrot.slane %v367, %v487
        %490 = vbcast.lane.b32.xlu0 %v488, 256
        %v491 = vpop.permute.xlu0 %490
        %v492 = vlaneseq
        %v493 = vshrl.u32 %v492, 7
        %v494 = vsub.s32 0, %v493
        %v495 = vrot.slane %v410, %v494
        %v496 = vlaneseq
        %v497 = vshrl.u32 %v496, 7
        %v498 = vsub.s32 0, %v497
        %v499 = vrot.slane %v424, %v498
        %v500 = vlaneseq
        %v501 = vshrl.u32 %v500, 7
        %v502 = vsub.s32 0, %v501
        %v503 = vrot.slane %v432, %v502
        %v504 = vlaneseq
        %v505 = vshrl.u32 %v504, 7
        %v506 = vsub.s32 0, %v505
        %v507 = vrot.slane %v434, %v506
        %v508 = vlaneseq
        %v509 = vshrl.u32 %v508, 7
        %v510 = vsub.s32 0, %v509
        %v511 = vrot.slane %v417, %v510
        %v512 = vlaneseq
        %v513 = vshrl.u32 %v512, 7
        %v514 = vsub.s32 0, %v513
        %v515 = vrot.slane %v431, %v514
        %v516 = vlaneseq
        %v517 = vshrl.u32 %v516, 7
        %v518 = vsub.s32 0, %v517
        %v519 = vrot.slane %v433, %v518
        %v520 = vlaneseq
        %v521 = vshrl.u32 %v520, 7
        %v522 = vsub.s32 0, %v521
        %v523 = vrot.slane %v435, %v522
        %v532 = vadd.f32 %v495, %v442
        %v533 = vadd.f32 %v499, %v449
        %v534 = vadd.f32 %v503, %v456
        %v535 = vadd.f32 %v507, %v463
        %v536 = vadd.f32 %v511, %v470
        %v537 = vadd.f32 %v515, %v477
        %v538 = vadd.f32 %v519, %v484
        %v539 = vadd.f32 %v523, %v491
        %v541 = vcombine.high %v366, %v366
        %v543 = vunpack.c.l.s4 1966171168
        %v544 = vunpack.c.0.s8 %v543
        %v545 = vlaneseq
        %v546 = vshrl.u32 %v545, 7
        %v547 = vsub.s32 %v544, %v546
        %v548 = vrot.slane %v366, %v547
        %v550 = vunpack.c.l.s4 1966171168
        %v551 = vunpack.c.0.s8 %v550
        %v552 = vlaneseq
        %v553 = vshrl.u32 %v552, 7
        %v554 = vsub.s32 %v551, %v553
        %v555 = vrot.slane %v541, %v554
        %v556 = vcombine.high %v548, %v548
        %v557 = vcombine.high %v555, %v555
        %v559 = vunpack.c.l.s4 1966171168
        %v560 = vunpack.c.0.s8 %v559
        %v561 = vlaneseq
        %v562 = vshrl.u32 %v561, 7
        %v563 = vsub.s32 %v560, %v562
        %v564 = vrot.slane %v548, %v563
        %v566 = vunpack.c.l.s4 1966171168
        %v567 = vunpack.c.0.s8 %v566
        %v568 = vlaneseq
        %v569 = vshrl.u32 %v568, 7
        %v570 = vsub.s32 %v567, %v569
        %v571 = vrot.slane %v555, %v570
        %v573 = vunpack.c.l.s4 1966171168
        %v574 = vunpack.c.0.s8 %v573
        %v575 = vlaneseq
        %v576 = vshrl.u32 %v575, 7
        %v577 = vsub.s32 %v574, %v576
        %v578 = vrot.slane %v556, %v577
        %v580 = vunpack.c.l.s4 1966171168
        %v581 = vunpack.c.0.s8 %v580
        %v582 = vlaneseq
        %v583 = vshrl.u32 %v582, 7
        %v584 = vsub.s32 %v581, %v583
        %v585 = vrot.slane %v557, %v584
        %v586 = vcombine.high %v564, %v564
        %v587 = vcombine.high %v571, %v571
        %v588 = vcombine.high %v578, %v578
        %v589 = vcombine.high %v585, %v585
        %v590 = vlaneseq
        %v591 = vshrl.u32 %v590, 7
        %v592 = vsub.s32 0, %v591
        %v593 = vrot.slane %v368, %v592
        %595 = vbcast.lane.b32.xlu0 %v593, 256
        %v596 = vpop.permute.xlu0 %595
        %v597 = vlaneseq
        %v598 = vshrl.u32 %v597, 7
        %v599 = vsub.s32 1, %v598
        %v600 = vrot.slane %v368, %v599
        %602 = vbcast.lane.b32.xlu0 %v600, 256
        %v603 = vpop.permute.xlu0 %602
        %v604 = vlaneseq
        %v605 = vshrl.u32 %v604, 7
        %v606 = vsub.s32 2, %v605
        %v607 = vrot.slane %v368, %v606
        %609 = vbcast.lane.b32.xlu0 %v607, 256
        %v610 = vpop.permute.xlu0 %609
        %v611 = vlaneseq
        %v612 = vshrl.u32 %v611, 7
        %v613 = vsub.s32 3, %v612
        %v614 = vrot.slane %v368, %v613
        %616 = vbcast.lane.b32.xlu0 %v614, 256
        %v617 = vpop.permute.xlu0 %616
        %v618 = vlaneseq
        %v619 = vshrl.u32 %v618, 7
        %v620 = vsub.s32 4, %v619
        %v621 = vrot.slane %v368, %v620
        %623 = vbcast.lane.b32.xlu0 %v621, 256
        %v624 = vpop.permute.xlu0 %623
        %v625 = vlaneseq
        %v626 = vshrl.u32 %v625, 7
        %v627 = vsub.s32 5, %v626
        %v628 = vrot.slane %v368, %v627
        %630 = vbcast.lane.b32.xlu0 %v628, 256
        %v631 = vpop.permute.xlu0 %630
        %v632 = vlaneseq
        %v633 = vshrl.u32 %v632, 7
        %v634 = vsub.s32 6, %v633
        %v635 = vrot.slane %v368, %v634
        %637 = vbcast.lane.b32.xlu0 %v635, 256
        %v638 = vpop.permute.xlu0 %637
        %v639 = vlaneseq
        %v640 = vshrl.u32 %v639, 7
        %v641 = vsub.s32 7, %v640
        %v642 = vrot.slane %v368, %v641
        %644 = vbcast.lane.b32.xlu0 %v642, 256
        %v645 = vpop.permute.xlu0 %644
        %v646 = vlaneseq
        %v647 = vshrl.u32 %v646, 7
        %v648 = vsub.s32 0, %v647
        %v649 = vrot.slane %v564, %v648
        %v650 = vlaneseq
        %v651 = vshrl.u32 %v650, 7
        %v652 = vsub.s32 0, %v651
        %v653 = vrot.slane %v578, %v652
        %v654 = vlaneseq
        %v655 = vshrl.u32 %v654, 7
        %v656 = vsub.s32 0, %v655
        %v657 = vrot.slane %v586, %v656
        %v658 = vlaneseq
        %v659 = vshrl.u32 %v658, 7
        %v660 = vsub.s32 0, %v659
        %v661 = vrot.slane %v588, %v660
        %v662 = vlaneseq
        %v663 = vshrl.u32 %v662, 7
        %v664 = vsub.s32 0, %v663
        %v665 = vrot.slane %v571, %v664
        %v666 = vlaneseq
        %v667 = vshrl.u32 %v666, 7
        %v668 = vsub.s32 0, %v667
        %v669 = vrot.slane %v585, %v668
        %v670 = vlaneseq
        %v671 = vshrl.u32 %v670, 7
        %v672 = vsub.s32 0, %v671
        %v673 = vrot.slane %v587, %v672
        %v674 = vlaneseq
        %v675 = vshrl.u32 %v674, 7
        %v676 = vsub.s32 0, %v675
        %v677 = vrot.slane %v589, %v676
        %v686 = vsub.f32 %v649, %v596
        %v687 = vsub.f32 %v653, %v603
        %v688 = vsub.f32 %v657, %v610
        %v689 = vsub.f32 %v661, %v617
        %v690 = vsub.f32 %v665, %v624
        %v691 = vsub.f32 %v669, %v631
        %v692 = vsub.f32 %v673, %v638
        %v693 = vsub.f32 %v677, %v645
        %v694 = vmul.f32 %v686, %v385
        %v695 = vmul.f32 %v687, %v385
        %v696 = vmul.f32 %v688, %v385
        %v697 = vmul.f32 %v689, %v385
        %v698 = vmul.f32 %v690, %v385
        %v699 = vmul.f32 %v691, %v385
        %v700 = vmul.f32 %v692, %v385
        %v701 = vmul.f32 %v693, %v385
        %v702 = vadd.f32 %v532, %v694
        %v703 = vadd.f32 %v533, %v695
        %v704 = vadd.f32 %v534, %v696
        %v705 = vadd.f32 %v535, %v697
        %v706 = vadd.f32 %v536, %v698
        %v707 = vadd.f32 %v537, %v699
        %v708 = vadd.f32 %v538, %v700
        %v709 = vadd.f32 %v539, %v701
        %vm710 = vcmask 64512
        %711 = vst.msk [vmem:[%s323] sm:$0xff] %vm710, %v702
        %712 = vst.msk [vmem:[%s323 + $0x8] sm:$0xff] %vm710, %v703
        %713 = vst.msk [vmem:[%s323 + $0x10] sm:$0xff] %vm710, %v704
        %714 = vst.msk [vmem:[%s323 + $0x18] sm:$0xff] %vm710, %v705
        %715 = vst.msk [vmem:[%s323 + $0x20] sm:$0xff] %vm710, %v706
        %716 = vst.msk [vmem:[%s323 + $0x28] sm:$0xff] %vm710, %v707
        %717 = vst.msk [vmem:[%s323 + $0x30] sm:$0xff] %vm710, %v708
        %718 = vst.msk [vmem:[%s323 + $0x38] sm:$0xff] %vm710, %v709
        %s719 = sand.u32 %s178, 1
        %s720 = scalar_lea.sflag [#allocation3], %s719
        %s721 = sand.u32 %s178, 1
        %s722 = smul.addr %s721, 64
        %s723 = scalar_lea.vmem [#allocation2], %s722
        // Predicated region
        $region37: #{span_labeler_forward.3} parent=35 // pred_check
          %p724 = pneg %p188
        $region38: #{span_labeler_forward.3} parent=35 // pred_check_branch
          %726 = sbr.rel (%p724) target = $region40
        $region39: #{span_labeler_forward.3} parent=35 // pred_region
          %s727 = smul.u32 8, %s25
          %s729 = ssub.s32 1024, 1024
          %730 = vsyncadd %s720, %s729
          %s731 = sadd.s32 %s27, %s26
          %s732 = sadd.s32 %s731, %s727
          %s733 = smul.addr %s24, 8
          %s734 = sadd.s32 %s732, %s733
          %s735 = smul.addr %s734, 128
          %s736 = scalar_lea.hbm %s4, %s735
          %s737 = sshll.u32 %s723, 4
          %s738 = int_to_ptr.vmem [resolvable:$true] %s737
          %743 = dma.vmem_to_hbm [thread:$0]  %s738, 1024, %s736, %s720, 128, 128, 8
        $region40: #{span_labeler_forward.3} parent=35 // pred_fallthru
          _
      $region36: #{span_labeler_forward.3} parent=5 // pred_fallthru
        _
      %p744 = scmp.le.s32.totalorder 2, %s13
      // Predicated region
      $region41: #{span_labeler_forward.3} parent=5 // pred_check
        %p745 = pneg %p744
      $region42: #{span_labeler_forward.3} parent=5 // pred_check_branch
        %747 = sbr.rel (%p745) target = $region44
      $region43: #{span_labeler_forward.3} parent=5 // pred_region
        %s748 = ssub.s32 %s13, 2
        // Predicated region
        $region45: #{span_labeler_forward.3} parent=43 // pred_check
          %p749 = pneg %p194
        $region46: #{span_labeler_forward.3} parent=43 // pred_check_branch
          %751 = sbr.rel (%p749) target = $region48
        $region47: #{span_labeler_forward.3} parent=43 // pred_region
          %s752 = sand.u32 %s179, 1
          %s753 = scalar_lea.sflag [#allocation3], %s752
          %s754 = sand.u32 %s179, 1
          %s755 = smul.addr %s754, 64
          %s756 = scalar_lea.vmem [#allocation2], %s755
          %757 = dma.done %s753, 1024
        $region48: #{span_labeler_forward.3} parent=43 // pred_fallthru
          _
      $region44: #{span_labeler_forward.3} parent=5 // pred_fallthru
        _
    $region6: #{span_labeler_forward.3} parent=1 // loop_footer
      %s17 = sadd.s32 1, %s13
    $region7: #{span_labeler_forward.3} parent=1 // loop_footer_branch
      %12 = sbr.rel target = $region3
    $region8: #{span_labeler_forward.3} parent=1 // loop_exit
      _
    %758 = vsyncpa [#allocation3], 1
    %s759 = scalar_lea.sflag [#allocation3], 1
    %760 = vsyncpa %s759, 1

</llo_original>
